<compile_context>
chip_gen: v5e
topology: v5e:2x2
jax: 0.10.0
libtpu: 0.0.40
codegen_flags: <defaults>
</compile_context>

<pallas_src>
import jax
import jax.numpy as jnp
from jax.experimental import pallas as pl
from jax.experimental.pallas import tpu as pltpu

LANE = 128  # vreg lane width
SUB = 8     # f32 sublane count


def _round_up(n: int, m: int) -> int:
    return ((n + m - 1) // m) * m


def mlp_kernel(x_ref, w1_ref, b1_ref, w2_ref, b2_ref, out_ref):
    # fc1: (Bp, INp) @ (INp, Hp) + (1, Hp) -> relu
    h = jnp.dot(x_ref[...], w1_ref[...], preferred_element_type=jnp.float32)
    h = jnp.maximum(h + b1_ref[...], 0.0)
    # fc2: (Bp, Hp) @ (Hp, OUTp) + (1, OUTp)
    y = jnp.dot(h, w2_ref[...], preferred_element_type=jnp.float32)
    out_ref[...] = (y + b2_ref[...]).astype(out_ref.dtype)


@jax.jit
def net_forward(x, w1, b1, w2, b2):
    """Pallas equivalent of Net.forward: fc2(relu(fc1(x)))."""
    B, in_size = x.shape
    hidden = w1.shape[1]
    out_size = w2.shape[1]

    # Lane/sublane-dense padded sizes.
    Bp = _round_up(B, SUB)
    INp = _round_up(in_size, LANE)
    Hp = _round_up(hidden, LANE)
    OUTp = _round_up(out_size, LANE)

    # Zero-pad: padded reduction rows contribute 0, padded bias columns are 0,
    # so the top-left (B, out_size) block of the padded result is exact.
    xp = jnp.pad(x, ((0, Bp - B), (0, INp - in_size)))
    w1p = jnp.pad(w1, ((0, INp - in_size), (0, Hp - hidden)))
    b1p = jnp.pad(b1, ((0, 0), (0, Hp - hidden)))
    w2p = jnp.pad(w2, ((0, Hp - hidden), (0, OUTp - out_size)))
    b2p = jnp.pad(b2, ((0, 0), (0, OUTp - out_size)))

    vmem = pl.BlockSpec(memory_space=pltpu.MemorySpace.VMEM)
    yp = pl.pallas_call(
        mlp_kernel,
        out_shape=jax.ShapeDtypeStruct((Bp, OUTp), x.dtype),
        in_specs=[vmem, vmem, vmem, vmem, vmem],
        out_specs=vmem,
    )(xp, w1p, b1p, w2p, b2p)

    return yp[:B, :out_size]


def reference_forward(x, w1, b1, w2, b2):
    h = jnp.maximum(x @ w1 + b1, 0.0)
    return h @ w2 + b2


if __name__ == "__main__":
    # input_size = 40 is fixed in the original script; hidden/output sizes came
    # from a checkpoint we cannot read — pick small deterministic values.
    input_size = 40
    hidden_size = 32
    output_size = 3
    batch = 8

    key = jax.random.PRNGKey(0)
    k_x, k_w1, k_b1, k_w2, k_b2 = jax.random.split(key, 5)

    x = jax.random.normal(k_x, (batch, input_size), dtype=jnp.float32)

    # PyTorch-Linear-like uniform init, stored as (in_features, out_features).
    bound1 = 1.0 / (input_size ** 0.5)
    w1 = jax.random.uniform(k_w1, (input_size, hidden_size),
                            minval=-bound1, maxval=bound1, dtype=jnp.float32)
    b1 = jax.random.uniform(k_b1, (1, hidden_size),
                            minval=-bound1, maxval=bound1, dtype=jnp.float32)

    bound2 = 1.0 / (hidden_size ** 0.5)
    w2 = jax.random.uniform(k_w2, (hidden_size, output_size),
                            minval=-bound2, maxval=bound2, dtype=jnp.float32)
    b2 = jax.random.uniform(k_b2, (1, output_size),
                            minval=-bound2, maxval=bound2, dtype=jnp.float32)

    out = net_forward(x, w1, b1, w2, b2)
    out = jax.block_until_ready(out)

    ref = reference_forward(x, w1, b1, w2, b2)
    assert out.shape == (batch, output_size)
    assert jnp.allclose(out, ref, atol=1e-5, rtol=1e-5)

    print("KERNEL_OK")
</pallas_src>

<mosaic_0001>
module attributes {stable_mosaic.version = 11 : i64} {
  func.func @mlp_kernel(%arg0: memref<8x128xf32, #tpu.memory_space<vmem>>, %arg1: memref<128x128xf32, #tpu.memory_space<vmem>>, %arg2: memref<1x128xf32, #tpu.memory_space<vmem>>, %arg3: memref<128x128xf32, #tpu.memory_space<vmem>>, %arg4: memref<1x128xf32, #tpu.memory_space<vmem>>, %arg5: memref<8x128xf32, #tpu.memory_space<vmem>>) attributes {dimension_semantics = [], scalar_prefetch = 0 : i64, scratch_operands = 0 : i64, tpu.core_type = #tpu.core_type<tc>} {
    %c0 = arith.constant 0 : index
    %c0_0 = arith.constant 0 : index
    %0 = vector.load %arg0[%c0, %c0_0] : memref<8x128xf32, #tpu.memory_space<vmem>>, vector<8x128xf32>
    %c0_1 = arith.constant 0 : index
    %c0_2 = arith.constant 0 : index
    %1 = vector.load %arg1[%c0_1, %c0_2] : memref<128x128xf32, #tpu.memory_space<vmem>>, vector<128x128xf32>
    %cst = arith.constant dense<0.000000e+00> : vector<8x128xf32>
    %2 = tpu.matmul %0, %1, %cst {dimension_numbers = #tpu.dot_dimension_numbers<[1], [0], [0], [1], [0, 0, 1, 1], [], []>} : vector<8x128xf32>, vector<128x128xf32>, vector<8x128xf32> -> vector<8x128xf32>
    %c0_3 = arith.constant 0 : index
    %c0_4 = arith.constant 0 : index
    %3 = vector.load %arg2[%c0_3, %c0_4] : memref<1x128xf32, #tpu.memory_space<vmem>>, vector<1x128xf32>
    %4 = vector.broadcast %3 : vector<1x128xf32> to vector<8x128xf32>
    %5 = arith.addf %2, %4 : vector<8x128xf32>
    %cst_5 = arith.constant 0.000000e+00 : f32
    %6 = vector.broadcast %cst_5 : f32 to vector<8x128xf32>
    %7 = arith.maximumf %5, %6 : vector<8x128xf32>
    %c0_6 = arith.constant 0 : index
    %c0_7 = arith.constant 0 : index
    %8 = vector.load %arg3[%c0_6, %c0_7] : memref<128x128xf32, #tpu.memory_space<vmem>>, vector<128x128xf32>
    %cst_8 = arith.constant dense<0.000000e+00> : vector<8x128xf32>
    %9 = tpu.matmul %7, %8, %cst_8 {dimension_numbers = #tpu.dot_dimension_numbers<[1], [0], [0], [1], [0, 0, 1, 1], [], []>} : vector<8x128xf32>, vector<128x128xf32>, vector<8x128xf32> -> vector<8x128xf32>
    %c0_9 = arith.constant 0 : index
    %c0_10 = arith.constant 0 : index
    %10 = vector.load %arg4[%c0_9, %c0_10] : memref<1x128xf32, #tpu.memory_space<vmem>>, vector<1x128xf32>
    %11 = vector.broadcast %10 : vector<1x128xf32> to vector<8x128xf32>
    %12 = arith.addf %9, %11 : vector<8x128xf32>
    %c0_11 = arith.constant 0 : index
    %c0_12 = arith.constant 0 : index
    %13 = vector.load %arg5[%c0_11, %c0_12] : memref<8x128xf32, #tpu.memory_space<vmem>>, vector<8x128xf32>
    tpu.vector_store %arg5[%c0_11, %c0_12], %12 {strides = array<i32>} : memref<8x128xf32, #tpu.memory_space<vmem>>, vector<8x128xf32>,
    return
  }
}

</mosaic_0001>

<llo_original>
// kernel: net_forward.1
$region0: #{net_forward.1}
  #allocation0 [shape = 'u32[]', space=smem, size = 0x4, offset = 0x4, fixed_abs, tag = 'smem constant byte address 0x4 - core index']
  #allocation1 [shape = 'u32[72,128]{1,0:T(1,128)}', space=vmem, size = 0x9000, scoped, tag = 'internal scratch']
  %s0 = inlined_call_operand.vmem [shape: f32[8,128], index: 0, kind: input, shape index: {}]
  %s1 = inlined_call_operand.vmem [shape: f32[128,128], index: 1, kind: input, shape index: {}]
  %s2 = inlined_call_operand.vmem [shape: f32[1,128], index: 2, kind: input, shape index: {}]
  %s3 = inlined_call_operand.vmem [shape: f32[128,128], index: 3, kind: input, shape index: {}]
  %s4 = inlined_call_operand.vmem [shape: f32[1,128], index: 4, kind: input, shape index: {}]
  %s5 = inlined_call_operand.vmem [shape: f32[8,128], index: 5, kind: output, shape index: {}]
  %s6 = sld [smem:[#allocation0]]
  $region30: #{net_forward.1} parent=0
    _
  %s8 = ssub.s32 1, %s6
  %s9 = scalar_select 0, %s8, %s6
  // Predicated region
  $region2: #{net_forward.1} parent=0 // pred_check
    _
  $region3: #{net_forward.1} parent=0 // pred_check_branch
    %11 = sbr.rel (0) target = $region5
  $region4: #{net_forward.1} parent=0 // pred_region
    _
  $region5: #{net_forward.1} parent=0 // pred_fallthru
    _
  // Predicated region
  $region6: #{net_forward.1} parent=0 // pred_check
    _
  $region7: #{net_forward.1} parent=0 // pred_check_branch
    %13 = sbr.rel (0) target = $region9
  $region8: #{net_forward.1} parent=0 // pred_region
    _
  $region9: #{net_forward.1} parent=0 // pred_fallthru
    _
  // Predicated region
  $region10: #{net_forward.1} parent=0 // pred_check
    _
  $region11: #{net_forward.1} parent=0 // pred_check_branch
    %15 = sbr.rel (0) target = $region13
  $region12: #{net_forward.1} parent=0 // pred_region
    _
  $region13: #{net_forward.1} parent=0 // pred_fallthru
    _
  // Predicated region
  $region14: #{net_forward.1} parent=0 // pred_check
    _
  $region15: #{net_forward.1} parent=0 // pred_check_branch
    %17 = sbr.rel (0) target = $region17
  $region16: #{net_forward.1} parent=0 // pred_region
    _
  $region17: #{net_forward.1} parent=0 // pred_fallthru
    _
  // Predicated region
  $region18: #{net_forward.1} parent=0 // pred_check
    _
  $region19: #{net_forward.1} parent=0 // pred_check_branch
    %19 = sbr.rel (0) target = $region21
  $region20: #{net_forward.1} parent=0 // pred_region
    _
  $region21: #{net_forward.1} parent=0 // pred_fallthru
    _
  %v20 = vld [vmem:[%s0] sm:$0xff]
  %v21 = vld [vmem:[%s1] sm:$0xff]
  %v22 = vld [vmem:[%s1 + $0x8] sm:$0xff]
  %v23 = vld [vmem:[%s1 + $0x10] sm:$0xff]
  %v24 = vld [vmem:[%s1 + $0x18] sm:$0xff]
  %v25 = vld [vmem:[%s1 + $0x20] sm:$0xff]
  %v26 = vld [vmem:[%s1 + $0x28] sm:$0xff]
  %v27 = vld [vmem:[%s1 + $0x30] sm:$0xff]
  %v28 = vld [vmem:[%s1 + $0x38] sm:$0xff]
  %v29 = vld [vmem:[%s1 + $0x40] sm:$0xff]
  %v30 = vld [vmem:[%s1 + $0x48] sm:$0xff]
  %v31 = vld [vmem:[%s1 + $0x50] sm:$0xff]
  %v32 = vld [vmem:[%s1 + $0x58] sm:$0xff]
  %v33 = vld [vmem:[%s1 + $0x60] sm:$0xff]
  %v34 = vld [vmem:[%s1 + $0x68] sm:$0xff]
  %v35 = vld [vmem:[%s1 + $0x70] sm:$0xff]
  %v36 = vld [vmem:[%s1 + $0x78] sm:$0xff]
  %v37 = vld [vmem:[%s2] sm:$0x1]
  %v39 = vperm.slane %v37, 0
  %41 = vmatpush.msra.mxu0 %v36
  %42 = vmatpush.msra.mxu0 %v35
  %43 = vmatpush.msra.mxu0 %v34
  %44 = vmatpush.msra.mxu0 %v33
  %45 = vmatpush.msra.mxu0 %v32
  %46 = vmatpush.msra.mxu0 %v31
  %47 = vmatpush.msra.mxu0 %v30
  %48 = vmatpush.msra.mxu0 %v29
  %49 = vmatpush.msra.mxu0 %v28
  %50 = vmatpush.msra.mxu0 %v27
  %51 = vmatpush.msra.mxu0 %v26
  %52 = vmatpush.msra.mxu0 %v25
  %53 = vmatpush.msra.mxu0 %v24
  %54 = vmatpush.msra.mxu0 %v23
  %55 = vmatpush.msra.mxu0 %v22
  %56 = vmatpush.msra.mxu0 %v21
  %57 = vmatmul.f32.gmra.mxu0 %v20
  %v58 = vpop.f32.mrf.mxu0
  %v59 = vadd.f32 %v39, %v58
  %60 = vdwg.mxu0
  %v61 = vmax.f32 %v59, 0.0
  %v62 = vld [vmem:[%s3] sm:$0xff]
  %v63 = vld [vmem:[%s3 + $0x8] sm:$0xff]
  %v64 = vld [vmem:[%s3 + $0x10] sm:$0xff]
  %v65 = vld [vmem:[%s3 + $0x18] sm:$0xff]
  %v66 = vld [vmem:[%s3 + $0x20] sm:$0xff]
  %v67 = vld [vmem:[%s3 + $0x28] sm:$0xff]
  %v68 = vld [vmem:[%s3 + $0x30] sm:$0xff]
  %v69 = vld [vmem:[%s3 + $0x38] sm:$0xff]
  %v70 = vld [vmem:[%s3 + $0x40] sm:$0xff]
  %v71 = vld [vmem:[%s3 + $0x48] sm:$0xff]
  %v72 = vld [vmem:[%s3 + $0x50] sm:$0xff]
  %v73 = vld [vmem:[%s3 + $0x58] sm:$0xff]
  %v74 = vld [vmem:[%s3 + $0x60] sm:$0xff]
  %v75 = vld [vmem:[%s3 + $0x68] sm:$0xff]
  %v76 = vld [vmem:[%s3 + $0x70] sm:$0xff]
  %v77 = vld [vmem:[%s3 + $0x78] sm:$0xff]
  %v78 = vld [vmem:[%s4] sm:$0x1]
  %v80 = vperm.slane %v78, 0
  %82 = vmatpush.msra.mxu0 %v77
  %83 = vmatpush.msra.mxu0 %v76
  %84 = vmatpush.msra.mxu0 %v75
  %85 = vmatpush.msra.mxu0 %v74
  %86 = vmatpush.msra.mxu0 %v73
  %87 = vmatpush.msra.mxu0 %v72
  %88 = vmatpush.msra.mxu0 %v71
  %89 = vmatpush.msra.mxu0 %v70
  %90 = vmatpush.msra.mxu0 %v69
  %91 = vmatpush.msra.mxu0 %v68
  %92 = vmatpush.msra.mxu0 %v67
  %93 = vmatpush.msra.mxu0 %v66
  %94 = vmatpush.msra.mxu0 %v65
  %95 = vmatpush.msra.mxu0 %v64
  %96 = vmatpush.msra.mxu0 %v63
  %97 = vmatpush.msra.mxu0 %v62
  %98 = vmatmul.f32.gmra.mxu0 %v61
  %v99 = vpop.f32.mrf.mxu0
  %v100 = vadd.f32 %v80, %v99
  %101 = vdwg.mxu0
  %102 = vst [vmem:[%s5] sm:$0xff] %v100
  // Predicated region
  $region22: #{net_forward.1} parent=0 // pred_check
    _
  $region23: #{net_forward.1} parent=0 // pred_check_branch
    %104 = sbr.rel (0) target = $region25
  $region24: #{net_forward.1} parent=0 // pred_region
    _
  $region25: #{net_forward.1} parent=0 // pred_fallthru
    _
  // Predicated region
  $region26: #{net_forward.1} parent=0 // pred_check
    _
  $region27: #{net_forward.1} parent=0 // pred_check_branch
    %106 = sbr.rel (0) target = $region29
  $region28: #{net_forward.1} parent=0 // pred_region
    _
  $region29: #{net_forward.1} parent=0 // pred_fallthru
    _

</llo_original>
